<compile_context>
chip_gen: v7x
topology: tpu7x:2x2x1
jax: 0.10.0
libtpu: 0.0.40
codegen_flags: <defaults>
</compile_context>

<pallas_src>
import functools

import jax
import jax.numpy as jnp
from jax.experimental import pallas as pl
from jax.experimental.pallas import tpu as pltpu


def _round_up(x: int, m: int) -> int:
    return ((x + m - 1) // m) * m


def _vmem_budget_bytes() -> int:
    """~75% of physical per-core VMEM (headroom for compiler-internal scratch)."""
    cap = 128 * 1024 * 1024  # v5e/v6e physical; v7x reports 64 MiB via get_tpu_info
    try:
        info = pltpu.get_tpu_info()
        cap = int(getattr(info, "vmem_capacity_bytes", cap))
    except Exception:
        pass
    return (3 * cap) // 4


def _derive_vmem_limit(required_bytes: int, budget: int) -> int:
    return min(budget, max(2 * required_bytes, 32 * 1024 * 1024))


def _pick_streaming_tv(vocab, hidden, tm, n_pad, out_sz, budget):
    """Largest vocab tile (preferring multiples of 256) whose buffers fit."""
    for cand in (4096, 2048, 1024, 512, 256, 128):
        if cand > vocab or vocab % cand:
            continue
        req = (2 * tm * 4 + 2 * vocab * hidden * 2 + 2 * hidden * cand * 2
               + 2 * cand * 4 + 2 * tm * cand * out_sz + n_pad * hidden * 2)
        if req <= budget:
            return cand
    return 128 if vocab % 128 == 0 else vocab


# -----------------------------------------------------------------------------
# Shared in-kernel helper: bf16 one-hot gather + LayerNorm (gamma/beta folded out)
# -----------------------------------------------------------------------------
def _embed_ln_f32(ids, emb_ref, eps):
    """ids: [tm, 1] int32; emb_ref: [V, H] bf16 VMEM ref  ->  normalized [tm, H] f32."""
    tm = ids.shape[0]
    vocab = emb_ref.shape[0]
    iota = jax.lax.broadcasted_iota(jnp.int32, (tm, vocab), 1)
    onehot = (ids == iota).astype(emb_ref.dtype)          # bf16; 0/1 are exact
    x = jnp.dot(onehot, emb_ref[...], preferred_element_type=jnp.float32)  # [tm, H]
    mean = jnp.mean(x, axis=-1, keepdims=True)
    centered = x - mean
    var = jnp.mean(centered * centered, axis=-1, keepdims=True)
    return centered * jax.lax.rsqrt(var + eps)


# -----------------------------------------------------------------------------
# Path 1: resident head weight (W fits in VMEM). 1-D grid over row blocks.
# -----------------------------------------------------------------------------
def _resident_kernel(ids_ref, emb_ref, w_ref, bias_ref, o_ref, *, eps):
    """ids[tm,1] i32 | emb[V,H] bf16 | w[H,V] bf16 (gamma folded) | bias[1,V] f32
       -> o[tm,V] logits."""
    y = _embed_ln_f32(ids_ref[...], emb_ref, eps).astype(w_ref.dtype)   # bf16 [tm,H]
    logits = jnp.dot(y, w_ref[...], preferred_element_type=jnp.float32)
    o_ref[...] = (logits + bias_ref[...]).astype(o_ref.dtype)


# -----------------------------------------------------------------------------
# Path 2: streamed head weight. grid = (vocab tiles OUTER, row blocks INNER).
# W slab index depends only on the outer axis -> each slab streams from HBM once.
# Normalized hidden states live in a bf16 VMEM scratch computed at j == 0.
# -----------------------------------------------------------------------------
def _streaming_kernel(ids_ref, emb_ref, w_ref, bias_ref, o_ref, y_ref, *, eps):
    """ids[tm,1] | emb[V,H] bf16 | w[H,tv] bf16 | bias[1,tv] f32 | o[tm,tv]
       y scratch: [n_blocks, tm, H] bf16 (all row blocks, resident)."""
    j = pl.program_id(0)   # vocab tile (outer)
    i = pl.program_id(1)   # row block (inner)

    @pl.when(j == 0)
    def _compute_hidden_and_layernorm():
        y = _embed_ln_f32(ids_ref[...], emb_ref, eps)
        y_ref[i] = y.astype(y_ref.dtype)

    logits = jnp.dot(y_ref[i], w_ref[...], preferred_element_type=jnp.float32)
    o_ref[...] = (logits + bias_ref[...]).astype(o_ref.dtype)


# -----------------------------------------------------------------------------
# Wrapper: embedding gather -> LayerNorm -> lm_head, fused in one pallas_call
# -----------------------------------------------------------------------------
def fused_embed_ln_head(ids_flat, emb_table_bf16, w_folded_bf16, bias_v, *,
                        eps, tm=None, tv=None, logits_dtype=jnp.float32):
    """ids_flat [N] i32; emb [V,H] bf16; W' [H,V] bf16 (gamma folded); bias [V] f32
       -> logits [N, V] logits_dtype."""
    n = int(ids_flat.shape[0])
    vocab, hidden = emb_table_bf16.shape
    hidden_w, vocab_w = w_folded_bf16.shape
    assert hidden_w == hidden and vocab_w == vocab

    out_sz = jnp.dtype(logits_dtype).itemsize
    if tm is None:
        tm = min(256, _round_up(n, 16))
    tm = _round_up(tm, 16)            # bf16 packs 16 sublanes per vreg
    n_pad = _round_up(n, tm)
    budget = _vmem_budget_bytes()

    # Bytes if W is kept fully resident (inputs/outputs double-buffered).
    resident_bytes = (2 * tm * 4 + 2 * vocab * hidden * 2 + 2 * hidden * vocab * 2
                      + 2 * vocab * 4 + 2 * tm * vocab * out_sz)

    if tv is None:
        tv = vocab if resident_bytes <= budget else _pick_streaming_tv(
            vocab, hidden, tm, n_pad, out_sz, budget)

    ids_col = jnp.pad(ids_flat.astype(jnp.int32), (0, n_pad - n)).reshape(n_pad, 1)
    bias2 = bias_v.reshape(1, vocab).astype(jnp.float32)

    if tv == vocab:
        # -------- resident-W path: W & emb DMA'd once, one grid step per row block
        out = pl.pallas_call(
            functools.partial(_resident_kernel, eps=eps),
            grid_spec=pltpu.PrefetchScalarGridSpec(
                num_scalar_prefetch=0,
                grid=(n_pad // tm,),
                in_specs=[
                    pl.BlockSpec((tm, 1), lambda i: (i, 0)),           # token ids
                    pl.BlockSpec((vocab, hidden), lambda i: (0, 0)),   # emb table
                    pl.BlockSpec((hidden, vocab), lambda i: (0, 0)),   # head weight
                    pl.BlockSpec((1, vocab), lambda i: (0, 0)),        # bias
                ],
                out_specs=pl.BlockSpec((tm, vocab), lambda i: (i, 0)),
            ),
            out_shape=jax.ShapeDtypeStruct((n_pad, vocab), logits_dtype),
            compiler_params=pltpu.CompilerParams(
                dimension_semantics=("parallel",),
                vmem_limit_bytes=_derive_vmem_limit(resident_bytes, budget),
            ),
        )(ids_col, emb_table_bf16, w_folded_bf16, bias2)
    else:
        # -------- streaming path: vocab outer, W slab streamed exactly once,
        # normalized hidden resident in VMEM scratch.
        assert vocab % tv == 0 and tv % 128 == 0
        streaming_bytes = (2 * tm * 4 + 2 * vocab * hidden * 2 + 2 * hidden * tv * 2
                           + 2 * tv * 4 + 2 * tm * tv * out_sz + n_pad * hidden * 2)
        out = pl.pallas_call(
            functools.partial(_streaming_kernel, eps=eps),
            grid_spec=pltpu.PrefetchScalarGridSpec(
                num_scalar_prefetch=0,
                grid=(vocab // tv, n_pad // tm),     # vocab OUTER, rows INNER
                in_specs=[
                    pl.BlockSpec((tm, 1), lambda j, i: (i, 0)),          # token ids
                    pl.BlockSpec((vocab, hidden), lambda j, i: (0, 0)),  # emb table
                    pl.BlockSpec((hidden, tv), lambda j, i: (0, j)),     # W slab
                    pl.BlockSpec((1, tv), lambda j, i: (0, j)),          # bias slab
                ],
                out_specs=pl.BlockSpec((tm, tv), lambda j, i: (i, j)),
                scratch_shapes=[pltpu.VMEM((n_pad // tm, tm, hidden), jnp.bfloat16)],
            ),
            out_shape=jax.ShapeDtypeStruct((n_pad, vocab), logits_dtype),
            compiler_params=pltpu.CompilerParams(
                # The j==0 hoist of y requires sequential grid order; keep both
                # axes "arbitrary" (measured cost of not using "parallel" ~0).
                dimension_semantics=("arbitrary", "arbitrary"),
                vmem_limit_bytes=_derive_vmem_limit(streaming_bytes, budget),
            ),
        )(ids_col, emb_table_bf16, w_folded_bf16, bias2)
    return out[:n]


# -----------------------------------------------------------------------------
# Model wrapper (mirrors HybridLanguageModel.forward, eval mode, no labels)
# -----------------------------------------------------------------------------
class HybridLanguageModelPallas:
    def __init__(self, vocab_size=512, hidden_size=128, num_layers=2,
                 layer_norm_eps=1e-5, seed=0):
        self.vocab_size = vocab_size
        self.hidden_size = hidden_size
        self.num_layers = num_layers
        self.eps = layer_norm_eps

        key = jax.random.PRNGKey(seed)
        k_emb, k_head = jax.random.split(key)
        # nn.Embedding / nn.Linear: normal(mean=0, std=0.02); LayerNorm: ones/zeros.
        self.embed_tokens = (0.02 * jax.random.normal(
            k_emb, (vocab_size, hidden_size))).astype(jnp.float32)
        # torch lm_head.weight is [vocab, hidden]; keep f32 [H, V] for reference.
        self.lm_head_w = (0.02 * jax.random.normal(
            k_head, (vocab_size, hidden_size))).astype(jnp.float32).T     # [H, V]
        self.norm_gamma = jnp.ones((hidden_size,), jnp.float32)
        self.norm_beta = jnp.zeros((hidden_size,), jnp.float32)

        # Kernel-side parameters:
        #   bf16 embedding table (bf16 MXU gather, half resident VMEM),
        #   gamma folded into W in f32 then cast once to bf16,
        #   beta @ W folded into a per-vocab f32 bias.
        self.embed_tokens_bf16 = self.embed_tokens.astype(jnp.bfloat16)
        self.lm_head_w_folded = (self.norm_gamma[:, None] *
                                 self.lm_head_w).astype(jnp.bfloat16)     # [H, V]
        self.lm_head_bias = (self.norm_beta @ self.lm_head_w).astype(jnp.float32)

    def forward(self, input_ids, *, tm=None, tv=None, logits_dtype=jnp.float32):
        b, l = input_ids.shape
        ids_flat = input_ids.reshape(-1).astype(jnp.int32)

        # TODO(synk): HybridBlock layer stack (Mamba + local/global attn + SRTE +
        # gating) is defined in external modules not provided; treated as identity
        # for each of the num_layers layers. embed_dropout is identity in eval.
        for _ in range(self.num_layers):
            pass

        logits_flat = fused_embed_ln_head(
            ids_flat, self.embed_tokens_bf16, self.lm_head_w_folded,
            self.lm_head_bias, eps=self.eps, tm=tm, tv=tv,
            logits_dtype=logits_dtype)
        logits = logits_flat.reshape(b, l, self.vocab_size).astype(jnp.float32)
        return {
            "loss": None,
            "logits": logits,
            "past_key_values": None,
            "past_mamba_states": None,
            "aux_losses": {},
            "gate_stats": None,
        }


if __name__ == "__main__":
    model = HybridLanguageModelPallas(vocab_size=512, hidden_size=128,
                                      num_layers=2, seed=0)

    key = jax.random.PRNGKey(0)
    batch, seq = 2, 16
    input_ids = jax.random.randint(key, (batch, seq), 0, model.vocab_size,
                                   dtype=jnp.int32)

    # Pure-JAX f32 reference of the same (embed -> LayerNorm -> lm_head) path.
    ref_h = model.embed_tokens[input_ids.reshape(-1)]
    mu = ref_h.mean(-1, keepdims=True)
    var = ((ref_h - mu) ** 2).mean(-1, keepdims=True)
    ref_n = (ref_h - mu) / jnp.sqrt(var + model.eps)
    ref_n = ref_n * model.norm_gamma + model.norm_beta
    ref_logits = (ref_n @ model.lm_head_w).reshape(batch, seq, model.vocab_size)

    # Path 1: resident-W (default tiles; single-axis grid, W/emb DMA'd once).
    out = model.forward(input_ids)
    logits = jax.block_until_ready(out["logits"])
    assert logits.shape == (batch, seq, model.vocab_size)
    assert bool(jnp.all(jnp.isfinite(logits)))
    assert jnp.allclose(logits, ref_logits, atol=2e-2, rtol=2e-2), (
        float(jnp.max(jnp.abs(logits - ref_logits))))

    # Path 2: explicit streaming config (vocab outer, W slab streamed once,
    # normalized hidden resident in VMEM scratch) — exercises the j==0 hoist.
    out_s = model.forward(input_ids, tm=16, tv=128)
    logits_s = jax.block_until_ready(out_s["logits"])
    assert logits_s.shape == (batch, seq, model.vocab_size)
    assert bool(jnp.all(jnp.isfinite(logits_s)))
    assert jnp.allclose(logits_s, ref_logits, atol=2e-2, rtol=2e-2), (
        float(jnp.max(jnp.abs(logits_s - ref_logits))))

    print("KERNEL_OK")
</pallas_src>

<mosaic_0001>
module attributes {stable_mosaic.version = 11 : i64} {
  func.func @_resident_kernel(%arg0: i32, %arg1: memref<32x1xi32, #tpu.memory_space<vmem>>, %arg2: memref<512x128xbf16, #tpu.memory_space<vmem>>, %arg3: memref<128x512xbf16, #tpu.memory_space<vmem>>, %arg4: memref<1x512xf32, #tpu.memory_space<vmem>>, %arg5: memref<32x512xf32, #tpu.memory_space<vmem>>) attributes {dimension_semantics = [#tpu.dimension_semantics<parallel>], iteration_bounds = array<i64: 1>, scalar_prefetch = 0 : i64, scratch_operands = 0 : i64, tpu.core_type = #tpu.core_type<tc>, window_params = [{transform_indices = @transform_0, window_bounds = array<i64: 32, 1>}, {pipeline_mode = #tpu.pipeline_mode<synchronous>, transform_indices = @transform_1, window_bounds = array<i64: 512, 128>}, {pipeline_mode = #tpu.pipeline_mode<synchronous>, transform_indices = @transform_2, window_bounds = array<i64: 128, 512>}, {pipeline_mode = #tpu.pipeline_mode<synchronous>, transform_indices = @transform_3, window_bounds = array<i64: 1, 512>}, {transform_indices = @transform_4, window_bounds = array<i64: 32, 512>}]} {
    %c0 = arith.constant 0 : index
    %c0_0 = arith.constant 0 : index
    %0 = vector.load %arg1[%c0, %c0_0] : memref<32x1xi32, #tpu.memory_space<vmem>>, vector<32x1xi32>
    %1 = tpu.iota {dimensions = array<i32: 1>} : vector<32x512xi32>
    %2 = vector.broadcast %0 : vector<32x1xi32> to vector<32x512xi32>
    %3 = arith.cmpi eq, %2, %1 : vector<32x512xi32>
    %4 = arith.extui %3 : vector<32x512xi1> to vector<32x512xi32>
    %5 = arith.sitofp %4 : vector<32x512xi32> to vector<32x512xf32>
    %6 = arith.truncf %5 : vector<32x512xf32> to vector<32x512xbf16>
    %c0_1 = arith.constant 0 : index
    %c0_2 = arith.constant 0 : index
    %7 = vector.load %arg2[%c0_1, %c0_2] : memref<512x128xbf16, #tpu.memory_space<vmem>>, vector<512x128xbf16>
    %cst = arith.constant dense<0.000000e+00> : vector<32x128xf32>
    %8 = tpu.matmul %6, %7, %cst {dimension_numbers = #tpu.dot_dimension_numbers<[1], [0], [0], [1], [0, 0, 1, 1], [], []>} : vector<32x512xbf16>, vector<512x128xbf16>, vector<32x128xf32> -> vector<32x128xf32>
    %cst_3 = arith.constant dense<0.000000e+00> : vector<32xf32>
    %9 = vector.multi_reduction <add>, %8, %cst_3 [1] : vector<32x128xf32> to vector<32xf32>
    %10 = vector.shape_cast %9 : vector<32xf32> to vector<32x1xf32>
    %cst_4 = arith.constant 1.280000e+02 : f32
    %11 = vector.broadcast %cst_4 : f32 to vector<32x1xf32>
    %12 = arith.divf %10, %11 : vector<32x1xf32>
    %13 = vector.broadcast %12 : vector<32x1xf32> to vector<32x128xf32>
    %14 = arith.subf %8, %13 : vector<32x128xf32>
    %15 = arith.mulf %14, %14 : vector<32x128xf32>
    %cst_5 = arith.constant dense<0.000000e+00> : vector<32xf32>
    %16 = vector.multi_reduction <add>, %15, %cst_5 [1] : vector<32x128xf32> to vector<32xf32>
    %17 = vector.shape_cast %16 : vector<32xf32> to vector<32x1xf32>
    %cst_6 = arith.constant 1.280000e+02 : f32
    %18 = vector.broadcast %cst_6 : f32 to vector<32x1xf32>
    %19 = arith.divf %17, %18 : vector<32x1xf32>
    %cst_7 = arith.constant 9.99999974E-6 : f32
    %20 = vector.broadcast %cst_7 : f32 to vector<32x1xf32>
    %21 = arith.addf %19, %20 : vector<32x1xf32>
    %22 = math.rsqrt %21 : vector<32x1xf32>
    %23 = vector.broadcast %22 : vector<32x1xf32> to vector<32x128xf32>
    %24 = arith.mulf %14, %23 : vector<32x128xf32>
    %25 = arith.truncf %24 : vector<32x128xf32> to vector<32x128xbf16>
    %c0_8 = arith.constant 0 : index
    %c0_9 = arith.constant 0 : index
    %26 = vector.load %arg3[%c0_8, %c0_9] : memref<128x512xbf16, #tpu.memory_space<vmem>>, vector<128x512xbf16>
    %cst_10 = arith.constant dense<0.000000e+00> : vector<32x512xf32>
    %27 = tpu.matmul %25, %26, %cst_10 {dimension_numbers = #tpu.dot_dimension_numbers<[1], [0], [0], [1], [0, 0, 1, 1], [], []>} : vector<32x128xbf16>, vector<128x512xbf16>, vector<32x512xf32> -> vector<32x512xf32>
    %c0_11 = arith.constant 0 : index
    %c0_12 = arith.constant 0 : index
    %28 = vector.load %arg4[%c0_11, %c0_12] : memref<1x512xf32, #tpu.memory_space<vmem>>, vector<1x512xf32>
    %29 = vector.broadcast %28 : vector<1x512xf32> to vector<32x512xf32>
    %30 = arith.addf %27, %29 : vector<32x512xf32>
    %c0_13 = arith.constant 0 : index
    %c0_14 = arith.constant 0 : index
    %31 = vector.load %arg5[%c0_13, %c0_14] : memref<32x512xf32, #tpu.memory_space<vmem>>, vector<32x512xf32>
    tpu.vector_store %arg5[%c0_13, %c0_14], %30 {strides = array<i32>} : memref<32x512xf32, #tpu.memory_space<vmem>>, vector<32x512xf32>,
    return
  }
  func.func @transform_0(%arg0: i32) -> (i32, i32) {
    %c0_i32 = arith.constant 0 : i32
    %c0_i32_0 = arith.constant 0 : i32
    return %arg0, %c0_i32 : i32, i32
  }
  func.func @transform_1(%arg0: i32) -> (i32, i32) {
    %c0_i32 = arith.constant 0 : i32
    %c0_i32_0 = arith.constant 0 : i32
    %c0_i32_1 = arith.constant 0 : i32
    return %c0_i32, %c0_i32_0 : i32, i32
  }
  func.func @transform_2(%arg0: i32) -> (i32, i32) {
    %c0_i32 = arith.constant 0 : i32
    %c0_i32_0 = arith.constant 0 : i32
    %c0_i32_1 = arith.constant 0 : i32
    return %c0_i32, %c0_i32_0 : i32, i32
  }
  func.func @transform_3(%arg0: i32) -> (i32, i32) {
    %c0_i32 = arith.constant 0 : i32
    %c0_i32_0 = arith.constant 0 : i32
    %c0_i32_1 = arith.constant 0 : i32
    return %c0_i32, %c0_i32_0 : i32, i32
  }
  func.func @transform_4(%arg0: i32) -> (i32, i32) {
    %c0_i32 = arith.constant 0 : i32
    %c0_i32_0 = arith.constant 0 : i32
    return %arg0, %c0_i32 : i32, i32
  }
}

</mosaic_0001>

<llo_original>
// kernel: tpu_custom_call.1
$region0: #{tpu_custom_call.1}
  #allocation0 [shape = 'u32[]', space=smem, size = 0x4, offset = 0x4, fixed_abs, tag = 'smem constant byte address 0x4 - core index']
  #allocation1 [shape = 'u32[144,128]{1,0:T(1,128)}', space=vmem, size = 0x12000, scoped, tag = 'internal scratch']
  %s0 = inlined_call_operand.vmem [shape: s32[32,1], index: 0, kind: input, shape index: {}]
  %s1 = inlined_call_operand.hbm [shape: bf16[512,128], index: 1, kind: input, shape index: {}]
  %s2 = inlined_call_operand.hbm [shape: bf16[128,512], index: 2, kind: input, shape index: {}]
  %s3 = inlined_call_operand.vmem [shape: f32[1,512], index: 3, kind: input, shape index: {}]
  %s4 = inlined_call_operand.hbm [shape: f32[32,512], index: 4, kind: output, shape index: {}]
  %s5 = sld [smem:[#allocation0]]
  $region34: #{tpu_custom_call.1} parent=0
    _
  %s7 = ssub.s32 1, %s5
  %s8 = scalar_select 0, %s7, %s5
  $region1: #{tpu_custom_call.1} parent=0
    #allocation2 [shape = 'u8[131072]{0}', space=vmem, size = 0x20000, scoped, tag = 'input window, operand 1, single buffered']
    #allocation3 [shape = 's32[1]{0}', space=sflag, size = 0x4, scoped, tag = 'scoped memory for tpu_custom_call.1']
    #allocation4 [shape = 's32[1]{0}', space=sflag, size = 0x4, scoped, tag = 'scoped memory for tpu_custom_call.1']
    #allocation5 [shape = 'u8[131072]{0}', space=vmem, size = 0x20000, scoped, tag = 'input window, operand 2, single buffered']
    #allocation6 [shape = 's32[1]{0}', space=sflag, size = 0x4, scoped, tag = 'scoped memory for tpu_custom_call.1']
    #allocation7 [shape = 'u8[65536]{0}', space=vmem, size = 0x10000, scoped, tag = 'output window, operand 0, single buffered']
    %9 = vsyncpa [#allocation3], 0
    %10 = vsyncpa [#allocation6], 0
    %11 = vsyncpa [#allocation4], 0
    // Predicated region
    $region2: #{tpu_custom_call.1} parent=1 // pred_check
      _
    $region3: #{tpu_custom_call.1} parent=1 // pred_check_branch
      %13 = sbr.rel (0) target = $region5
    $region4: #{tpu_custom_call.1} parent=1 // pred_region
      _
    $region5: #{tpu_custom_call.1} parent=1 // pred_fallthru
      _
    // Predicated region
    $region6: #{tpu_custom_call.1} parent=1 // pred_check
      _
    $region7: #{tpu_custom_call.1} parent=1 // pred_check_branch
      %15 = sbr.rel (0) target = $region9
    $region8: #{tpu_custom_call.1} parent=1 // pred_region
      %s17 = ssub.s32 4096, 4096
      %18 = vsyncadd [#allocation3], %s17
      %s19 = sshll.u32 [#allocation2], 4
      %s20 = int_to_ptr.vmem [resolvable:$true] %s19
      %25 = dma.hbm_to_vmem [thread:$0]  %s1, 4096, %s20, [#allocation3], 64, 64, 4
    $region9: #{tpu_custom_call.1} parent=1 // pred_fallthru
      _
    // Predicated region
    $region10: #{tpu_custom_call.1} parent=1 // pred_check
      _
    $region11: #{tpu_custom_call.1} parent=1 // pred_check_branch
      %27 = sbr.rel (0) target = $region13
    $region12: #{tpu_custom_call.1} parent=1 // pred_region
      %s29 = ssub.s32 4096, 4096
      %30 = vsyncadd [#allocation6], %s29
      %s31 = sshll.u32 [#allocation5], 4
      %s32 = int_to_ptr.vmem [resolvable:$true] %s31
      %37 = dma.hbm_to_vmem [thread:$0]  %s2, 4096, %s32, [#allocation6], 256, 256, 16
    $region13: #{tpu_custom_call.1} parent=1 // pred_fallthru
      _
    // Predicated region
    $region14: #{tpu_custom_call.1} parent=1 // pred_check
      _
    $region15: #{tpu_custom_call.1} parent=1 // pred_check_branch
      %39 = sbr.rel (0) target = $region17
    $region16: #{tpu_custom_call.1} parent=1 // pred_region
      _
    $region17: #{tpu_custom_call.1} parent=1 // pred_fallthru
      _
    // Predicated region
    $region18: #{tpu_custom_call.1} parent=1 // pred_check
      _
    $region19: #{tpu_custom_call.1} parent=1 // pred_check_branch
      %41 = sbr.rel (0) target = $region21
    $region20: #{tpu_custom_call.1} parent=1 // pred_region
      %42 = dma.done [#allocation3], 4096
    $region21: #{tpu_custom_call.1} parent=1 // pred_fallthru
      _
    // Predicated region
    $region22: #{tpu_custom_call.1} parent=1 // pred_check
      _
    $region23: #{tpu_custom_call.1} parent=1 // pred_check_branch
      %44 = sbr.rel (0) target = $region25
    $region24: #{tpu_custom_call.1} parent=1 // pred_region
      %45 = dma.done [#allocation6], 4096
    $region25: #{tpu_custom_call.1} parent=1 // pred_fallthru
      _
    %v47 = vld [vmem:[%s0] sm:$0xff]
    %v48 = vld [vmem:[%s0 + $0x8] sm:$0xff]
    %v49 = vld [vmem:[%s0 + $0x10] sm:$0xff]
    %v50 = vld [vmem:[%s0 + $0x18] sm:$0xff]
    %v51 = vlaneseq
    %v52 = vand.u32 %v51, 127
    %v53 = vadd.s32 %v52, 128
    %v54 = vadd.s32 %v52, 256
    %v55 = vadd.s32 %v52, 384
    %56 = vset.pattern.permute.xlu0 0
    %57 = vperm.xlu0 %56, %v47
    %v58 = vpop.permute.xlu0 %57
    %59 = vset.pattern.permute.xlu0 0
    %60 = vperm.xlu0 %59, %v48
    %v61 = vpop.permute.xlu0 %60
    %62 = vset.pattern.permute.xlu0 0
    %63 = vperm.xlu0 %62, %v49
    %v64 = vpop.permute.xlu0 %63
    %65 = vset.pattern.permute.xlu0 0
    %66 = vperm.xlu0 %65, %v50
    %v67 = vpop.permute.xlu0 %66
    %vm68 = vcmp.eq.s32.totalorder %v58, %v52
    %vm69 = vcmp.eq.s32.totalorder %v58, %v53
    %vm70 = vcmp.eq.s32.totalorder %v58, %v54
    %vm71 = vcmp.eq.s32.totalorder %v58, %v55
    %vm72 = vcmp.eq.s32.totalorder %v61, %v52
    %vm73 = vcmp.eq.s32.totalorder %v61, %v53
    %vm74 = vcmp.eq.s32.totalorder %v61, %v54
    %vm75 = vcmp.eq.s32.totalorder %v61, %v55
    %vm76 = vcmp.eq.s32.totalorder %v64, %v52
    %vm77 = vcmp.eq.s32.totalorder %v64, %v53
    %vm78 = vcmp.eq.s32.totalorder %v64, %v54
    %vm79 = vcmp.eq.s32.totalorder %v64, %v55
    %vm80 = vcmp.eq.s32.totalorder %v67, %v52
    %vm81 = vcmp.eq.s32.totalorder %v67, %v53
    %vm82 = vcmp.eq.s32.totalorder %v67, %v54
    %vm83 = vcmp.eq.s32.totalorder %v67, %v55
    %v84 = vsel %vm68, 1, 0
    %v85 = vsel %vm69, 1, 0
    %v86 = vsel %vm70, 1, 0
    %v87 = vsel %vm71, 1, 0
    %v88 = vsel %vm72, 1, 0
    %v89 = vsel %vm73, 1, 0
    %v90 = vsel %vm74, 1, 0
    %v91 = vsel %vm75, 1, 0
    %v92 = vsel %vm76, 1, 0
    %v93 = vsel %vm77, 1, 0
    %v94 = vsel %vm78, 1, 0
    %v95 = vsel %vm79, 1, 0
    %v96 = vsel %vm80, 1, 0
    %v97 = vsel %vm81, 1, 0
    %v98 = vsel %vm82, 1, 0
    %v99 = vsel %vm83, 1, 0
    %v100 = vcvt.s32.f32 %v84
    %v101 = vcvt.s32.f32 %v85
    %v102 = vcvt.s32.f32 %v86
    %v103 = vcvt.s32.f32 %v87
    %v104 = vcvt.s32.f32 %v88
    %v105 = vcvt.s32.f32 %v89
    %v106 = vcvt.s32.f32 %v90
    %v107 = vcvt.s32.f32 %v91
    %v108 = vcvt.s32.f32 %v92
    %v109 = vcvt.s32.f32 %v93
    %v110 = vcvt.s32.f32 %v94
    %v111 = vcvt.s32.f32 %v95
    %v112 = vcvt.s32.f32 %v96
    %v113 = vcvt.s32.f32 %v97
    %v114 = vcvt.s32.f32 %v98
    %v115 = vcvt.s32.f32 %v99
    %v116 = vpack.c.bf16 %v104, %v100
    %v117 = vpack.c.bf16 %v105, %v101
    %v118 = vpack.c.bf16 %v106, %v102
    %v119 = vpack.c.bf16 %v107, %v103
    %v120 = vpack.c.bf16 %v112, %v108
    %v121 = vpack.c.bf16 %v113, %v109
    %v122 = vpack.c.bf16 %v114, %v110
    %v123 = vpack.c.bf16 %v115, %v111
    %v124 = vld [vmem:[#allocation2] sm:$0xf]
    %v125 = vld [vmem:[#allocation2 + $0x4] sm:$0xf]
    %v126 = vld [vmem:[#allocation2 + $0x8] sm:$0xf]
    %v127 = vld [vmem:[#allocation2 + $0xc] sm:$0xf]
    %v128 = vld [vmem:[#allocation2 + $0x10] sm:$0xf]
    %v129 = vld [vmem:[#allocation2 + $0x14] sm:$0xf]
    %v130 = vld [vmem:[#allocation2 + $0x18] sm:$0xf]
    %v131 = vld [vmem:[#allocation2 + $0x1c] sm:$0xf]
    %v132 = vld [vmem:[#allocation2 + $0x20] sm:$0xf]
    %v133 = vld [vmem:[#allocation2 + $0x24] sm:$0xf]
    %v134 = vld [vmem:[#allocation2 + $0x28] sm:$0xf]
    %v135 = vld [vmem:[#allocation2 + $0x2c] sm:$0xf]
    %v136 = vld [vmem:[#allocation2 + $0x30] sm:$0xf]
    %v137 = vld [vmem:[#allocation2 + $0x34] sm:$0xf]
    %v138 = vld [vmem:[#allocation2 + $0x38] sm:$0xf]
    %v139 = vld [vmem:[#allocation2 + $0x3c] sm:$0xf]
    %v140 = vld [vmem:[#allocation2 + $0x40] sm:$0xf]
    %v141 = vld [vmem:[#allocation2 + $0x44] sm:$0xf]
    %v142 = vld [vmem:[#allocation2 + $0x48] sm:$0xf]
    %v143 = vld [vmem:[#allocation2 + $0x4c] sm:$0xf]
    %v144 = vld [vmem:[#allocation2 + $0x50] sm:$0xf]
    %v145 = vld [vmem:[#allocation2 + $0x54] sm:$0xf]
    %v146 = vld [vmem:[#allocation2 + $0x58] sm:$0xf]
    %v147 = vld [vmem:[#allocation2 + $0x5c] sm:$0xf]
    %v148 = vld [vmem:[#allocation2 + $0x60] sm:$0xf]
    %v149 = vld [vmem:[#allocation2 + $0x64] sm:$0xf]
    %v150 = vld [vmem:[#allocation2 + $0x68] sm:$0xf]
    %v151 = vld [vmem:[#allocation2 + $0x6c] sm:$0xf]
    %v152 = vld [vmem:[#allocation2 + $0x70] sm:$0xf]
    %v153 = vld [vmem:[#allocation2 + $0x74] sm:$0xf]
    %v154 = vld [vmem:[#allocation2 + $0x78] sm:$0xf]
    %v155 = vld [vmem:[#allocation2 + $0x7c] sm:$0xf]
    %v156 = vld [vmem:[#allocation2 + $0x80] sm:$0xf]
    %v157 = vld [vmem:[#allocation2 + $0x84] sm:$0xf]
    %v158 = vld [vmem:[#allocation2 + $0x88] sm:$0xf]
    %v159 = vld [vmem:[#allocation2 + $0x8c] sm:$0xf]
    %v160 = vld [vmem:[#allocation2 + $0x90] sm:$0xf]
    %v161 = vld [vmem:[#allocation2 + $0x94] sm:$0xf]
    %v162 = vld [vmem:[#allocation2 + $0x98] sm:$0xf]
    %v163 = vld [vmem:[#allocation2 + $0x9c] sm:$0xf]
    %v164 = vld [vmem:[#allocation2 + $0xa0] sm:$0xf]
    %v165 = vld [vmem:[#allocation2 + $0xa4] sm:$0xf]
    %v166 = vld [vmem:[#allocation2 + $0xa8] sm:$0xf]
    %v167 = vld [vmem:[#allocation2 + $0xac] sm:$0xf]
    %v168 = vld [vmem:[#allocation2 + $0xb0] sm:$0xf]
    %v169 = vld [vmem:[#allocation2 + $0xb4] sm:$0xf]
    %v170 = vld [vmem:[#allocation2 + $0xb8] sm:$0xf]
    %v171 = vld [vmem:[#allocation2 + $0xbc] sm:$0xf]
    %v172 = vld [vmem:[#allocation2 + $0xc0] sm:$0xf]
    %v173 = vld [vmem:[#allocation2 + $0xc4] sm:$0xf]
    %v174 = vld [vmem:[#allocation2 + $0xc8] sm:$0xf]
    %v175 = vld [vmem:[#allocation2 + $0xcc] sm:$0xf]
    %v176 = vld [vmem:[#allocation2 + $0xd0] sm:$0xf]
    %v177 = vld [vmem:[#allocation2 + $0xd4] sm:$0xf]
    %v178 = vld [vmem:[#allocation2 + $0xd8] sm:$0xf]
    %v179 = vld [vmem:[#allocation2 + $0xdc] sm:$0xf]
    %v180 = vld [vmem:[#allocation2 + $0xe0] sm:$0xf]
    %v181 = vld [vmem:[#allocation2 + $0xe4] sm:$0xf]
    %v182 = vld [vmem:[#allocation2 + $0xe8] sm:$0xf]
    %v183 = vld [vmem:[#allocation2 + $0xec] sm:$0xf]
    %v184 = vld [vmem:[#allocation2 + $0xf0] sm:$0xf]
    %v185 = vld [vmem:[#allocation2 + $0xf4] sm:$0xf]
    %v186 = vld [vmem:[#allocation2 + $0xf8] sm:$0xf]
    %v187 = vld [vmem:[#allocation2 + $0xfc] sm:$0xf]
    %v252 = vunpack.c.l.b16 %v124
    %v253 = vunpack.c.l.b16 %v125
    %v254 = vunpack.c.l.b16 %v126
    %v255 = vunpack.c.l.b16 %v127
    %v256 = vunpack.c.l.b16 %v128
    %v257 = vunpack.c.l.b16 %v129
    %v258 = vunpack.c.l.b16 %v130
    %v259 = vunpack.c.l.b16 %v131
    %v260 = vunpack.c.l.b16 %v132
    %v261 = vunpack.c.l.b16 %v133
    %v262 = vunpack.c.l.b16 %v134
    %v263 = vunpack.c.l.b16 %v135
    %v264 = vunpack.c.l.b16 %v136
    %v265 = vunpack.c.l.b16 %v137
    %v266 = vunpack.c.l.b16 %v138
    %v267 = vunpack.c.l.b16 %v139
    %v268 = vunpack.c.l.b16 %v140
    %v269 = vunpack.c.l.b16 %v141
    %v270 = vunpack.c.l.b16 %v142
    %v271 = vunpack.c.l.b16 %v143
    %v272 = vunpack.c.l.b16 %v144
    %v273 = vunpack.c.l.b16 %v145
    %v274 = vunpack.c.l.b16 %v146
    %v275 = vunpack.c.l.b16 %v147
    %v276 = vunpack.c.l.b16 %v148
    %v277 = vunpack.c.l.b16 %v149
    %v278 = vunpack.c.l.b16 %v150
    %v279 = vunpack.c.l.b16 %v151
    %v280 = vunpack.c.l.b16 %v152
    %v281 = vunpack.c.l.b16 %v153
    %v282 = vunpack.c.l.b16 %v154
    %v283 = vunpack.c.l.b16 %v155
    %v284 = vunpack.c.l.b16 %v156
    %v285 = vunpack.c.l.b16 %v157
    %v286 = vunpack.c.l.b16 %v158
    %v287 = vunpack.c.l.b16 %v159
    %v288 = vunpack.c.l.b16 %v160
    %v289 = vunpack.c.l.b16 %v161
    %v290 = vunpack.c.l.b16 %v162
    %v291 = vunpack.c.l.b16 %v163
    %v292 = vunpack.c.l.b16 %v164
    %v293 = vunpack.c.l.b16 %v165
    %v294 = vunpack.c.l.b16 %v166
    %v295 = vunpack.c.l.b16 %v167
    %v296 = vunpack.c.l.b16 %v168
    %v297 = vunpack.c.l.b16 %v169
    %v298 = vunpack.c.l.b16 %v170
    %v299 = vunpack.c.l.b16 %v171
    %v300 = vunpack.c.l.b16 %v172
    %v301 = vunpack.c.l.b16 %v173
    %v302 = vunpack.c.l.b16 %v174
    %v303 = vunpack.c.l.b16 %v175
    %v304 = vunpack.c.l.b16 %v176
    %v305 = vunpack.c.l.b16 %v177
    %v306 = vunpack.c.l.b16 %v178
    %v307 = vunpack.c.l.b16 %v179
    %v308 = vunpack.c.l.b16 %v180
    %v309 = vunpack.c.l.b16 %v181
    %v310 = vunpack.c.l.b16 %v182
    %v311 = vunpack.c.l.b16 %v183
    %v312 = vunpack.c.l.b16 %v184
    %v313 = vunpack.c.l.b16 %v185
    %v314 = vunpack.c.l.b16 %v186
    %v315 = vunpack.c.l.b16 %v187
    %v316 = vpack.c.b16 %v253, %v252
    %v317 = vpack.c.b16 %v255, %v254
    %v318 = vpack.c.b16 %v257, %v256
    %v319 = vpack.c.b16 %v259, %v258
    %v320 = vpack.c.b16 %v261, %v260
    %v321 = vpack.c.b16 %v263, %v262
    %v322 = vpack.c.b16 %v265, %v264
    %v323 = vpack.c.b16 %v267, %v266
    %v324 = vpack.c.b16 %v269, %v268
    %v325 = vpack.c.b16 %v271, %v270
    %v326 = vpack.c.b16 %v273, %v272
    %v327 = vpack.c.b16 %v275, %v274
    %v328 = vpack.c.b16 %v277, %v276
    %v329 = vpack.c.b16 %v279, %v278
    %v330 = vpack.c.b16 %v281, %v280
    %v331 = vpack.c.b16 %v283, %v282
    %v332 = vpack.c.b16 %v285, %v284
    %v333 = vpack.c.b16 %v287, %v286
    %v334 = vpack.c.b16 %v289, %v288
    %v335 = vpack.c.b16 %v291, %v290
    %v336 = vpack.c.b16 %v293, %v292
    %v337 = vpack.c.b16 %v295, %v294
    %v338 = vpack.c.b16 %v297, %v296
    %v339 = vpack.c.b16 %v299, %v298
    %v340 = vpack.c.b16 %v301, %v300
    %v341 = vpack.c.b16 %v303, %v302
    %v342 = vpack.c.b16 %v305, %v304
    %v343 = vpack.c.b16 %v307, %v306
    %v344 = vpack.c.b16 %v309, %v308
    %v345 = vpack.c.b16 %v311, %v310
    %v346 = vpack.c.b16 %v313, %v312
    %v347 = vpack.c.b16 %v315, %v314
    %380 = vmatprep.subr.bf16.mxu0 0
    %381 = vmatpush1.bf16.msra.mxu0 %v316
    %382 = vmatprep.subr.bf16.mxu0 0
    %383 = vmatpush1.bf16.msra.mxu0 %v317
    %384 = vmatprep.subr.bf16.mxu0 0
    %385 = vmatpush1.bf16.msra.mxu0 %v318
    %386 = vmatprep.subr.bf16.mxu0 0
    %387 = vmatpush1.bf16.msra.mxu0 %v319
    %388 = vmatprep.subr.bf16.mxu0 0
    %389 = vmatpush1.bf16.msra.mxu0 %v320
    %390 = vmatprep.subr.bf16.mxu0 0
    %391 = vmatpush1.bf16.msra.mxu0 %v321
    %392 = vmatprep.subr.bf16.mxu0 0
    %393 = vmatpush1.bf16.msra.mxu0 %v322
    %394 = vmatprep.subr.bf16.mxu0 0
    %395 = vmatpush1.bf16.msra.mxu0 %v323
    %396 = vmatprep.subr.bf16.mxu0 0
    %397 = vmatpush1.bf16.msra.mxu0 %v324
    %398 = vmatprep.subr.bf16.mxu0 0
    %399 = vmatpush1.bf16.msra.mxu0 %v325
    %400 = vmatprep.subr.bf16.mxu0 0
    %401 = vmatpush1.bf16.msra.mxu0 %v326
    %402 = vmatprep.subr.bf16.mxu0 0
    %403 = vmatpush1.bf16.msra.mxu0 %v327
    %404 = vmatprep.subr.bf16.mxu0 0
    %405 = vmatpush1.bf16.msra.mxu0 %v328
    %406 = vmatprep.subr.bf16.mxu0 0
    %407 = vmatpush1.bf16.msra.mxu0 %v329
    %408 = vmatprep.subr.bf16.mxu0 0
    %409 = vmatpush1.bf16.msra.mxu0 %v330
    %410 = vmatprep.subr.bf16.mxu0 0
    %411 = vmatpush1.bf16.msra.mxu0 %v331
    %412 = vmatprep.mubr.bf16.mxu0 %v117
    %413 = vmatmul.mubr.bf16.gmra.mrb[0].mxu0 %v116
    %v414 = vpop.f32.mrb[0].mxu0
    %v415 = vadd.f32 0.0, %v414
    %v416 = vpop.f32.mrb[0].mxu0
    %v417 = vpop.f32.mrb[0].mxu0
    %v418 = vadd.f32 0.0, %v417
    %v419 = vpop.f32.mrb[0].mxu0
    %420 = vmatprep.mubr.bf16.mxu0 %v121
    %421 = vmatmul.mubr.bf16.gmra.mrb[0].mxu0 %v120
    %v422 = vpop.f32.mrb[0].mxu0
    %v423 = vadd.f32 0.0, %v422
    %v424 = vpop.f32.mrb[0].mxu0
    %v425 = vpop.f32.mrb[0].mxu0
    %v426 = vadd.f32 0.0, %v425
    %v427 = vpop.f32.mrb[0].mxu0
    %428 = vdwg.mxu0
    %429 = vmatprep.subr.bf16.mxu0 0
    %430 = vmatpush1.bf16.msra.mxu0 %v332
    %431 = vmatprep.subr.bf16.mxu0 0
    %432 = vmatpush1.bf16.msra.mxu0 %v333
    %433 = vmatprep.subr.bf16.mxu0 0
    %434 = vmatpush1.bf16.msra.mxu0 %v334
    %435 = vmatprep.subr.bf16.mxu0 0
    %436 = vmatpush1.bf16.msra.mxu0 %v335
    %437 = vmatprep.subr.bf16.mxu0 0
    %438 = vmatpush1.bf16.msra.mxu0 %v336
    %439 = vmatprep.subr.bf16.mxu0 0
    %440 = vmatpush1.bf16.msra.mxu0 %v337
    %441 = vmatprep.subr.bf16.mxu0 0
    %442 = vmatpush1.bf16.msra.mxu0 %v338
    %443 = vmatprep.subr.bf16.mxu0 0
    %444 = vmatpush1.bf16.msra.mxu0 %v339
    %445 = vmatprep.subr.bf16.mxu0 0
    %446 = vmatpush1.bf16.msra.mxu0 %v340
    %447 = vmatprep.subr.bf16.mxu0 0
    %448 = vmatpush1.bf16.msra.mxu0 %v341
    %449 = vmatprep.subr.bf16.mxu0 0
    %450 = vmatpush1.bf16.msra.mxu0 %v342
    %451 = vmatprep.subr.bf16.mxu0 0
    %452 = vmatpush1.bf16.msra.mxu0 %v343
    %453 = vmatprep.subr.bf16.mxu0 0
    %454 = vmatpush1.bf16.msra.mxu0 %v344
    %455 = vmatprep.subr.bf16.mxu0 0
    %456 = vmatpush1.bf16.msra.mxu0 %v345
    %457 = vmatprep.subr.bf16.mxu0 0
    %458 = vmatpush1.bf16.msra.mxu0 %v346
    %459 = vmatprep.subr.bf16.mxu0 0
    %460 = vmatpush1.bf16.msra.mxu0 %v347
    %461 = vmatprep.mubr.bf16.mxu0 %v119
    %462 = vmatmul.mubr.bf16.gmra.mrb[0].mxu0 %v118
    %v463 = vpop.f32.mrb[0].mxu0
    %v464 = vadd.f32 %v415, %v463
    %v465 = vpop.f32.mrb[0].mxu0
    %v466 = vpop.f32.mrb[0].mxu0
    %v467 = vadd.f32 %v418, %v466
    %v468 = vpop.f32.mrb[0].mxu0
    %469 = vmatprep.mubr.bf16.mxu0 %v123
    %470 = vmatmul.mubr.bf16.gmra.mrb[0].mxu0 %v122
    %v471 = vpop.f32.mrb[0].mxu0
    %v472 = vadd.f32 %v423, %v471
    %v473 = vpop.f32.mrb[0].mxu0
    %v474 = vpop.f32.mrb[0].mxu0
    %v475 = vadd.f32 %v426, %v474
    %v476 = vpop.f32.mrb[0].mxu0
    %477 = vdwg.mxu0
    %478 = vadd.xlane.f32.xlu0 %v464
    %v479 = vpop.xlane.xlu0 %478
    %480 = vadd.xlane.f32.xlu0 %v467
    %v481 = vpop.xlane.xlu0 %480
    %482 = vadd.xlane.f32.xlu0 %v472
    %v483 = vpop.xlane.xlu0 %482
    %484 = vadd.xlane.f32.xlu0 %v475
    %v485 = vpop.xlane.xlu0 %484
    %v486 = vrcp.pop 128.0
    %v487 = vmul.f32 %v479, %v486
    %v488 = vmul.f32 %v481, %v486
    %v489 = vmul.f32 %v483, %v486
    %v490 = vmul.f32 %v485, %v486
    %v491 = vsub.f32 %v464, %v487
    %v492 = vsub.f32 %v467, %v488
    %v493 = vsub.f32 %v472, %v489
    %v494 = vsub.f32 %v475, %v490
    %v495 = vmul.f32 %v491, %v491
    %v496 = vmul.f32 %v492, %v492
    %v497 = vmul.f32 %v493, %v493
    %v498 = vmul.f32 %v494, %v494
    %499 = vadd.xlane.f32.xlu0 %v495
    %v500 = vpop.xlane.xlu0 %499
    %501 = vadd.xlane.f32.xlu0 %v496
    %v502 = vpop.xlane.xlu0 %501
    %503 = vadd.xlane.f32.xlu0 %v497
    %v504 = vpop.xlane.xlu0 %503
    %505 = vadd.xlane.f32.xlu0 %v498
    %v506 = vpop.xlane.xlu0 %505
    %v507 = vmul.f32 %v500, %v486
    %v508 = vmul.f32 %v502, %v486
    %v509 = vmul.f32 %v504, %v486
    %v510 = vmul.f32 %v506, %v486
    %v511 = vadd.f32 %v507, 1e-05
    %v512 = vadd.f32 %v508, 1e-05
    %v513 = vadd.f32 %v509, 1e-05
    %v514 = vadd.f32 %v510, 1e-05
    %v515 = vrsqrt.pop %v511
    %v516 = vrsqrt.pop %v512
    %v517 = vrsqrt.pop %v513
    %v518 = vrsqrt.pop %v514
    %v519 = vmul.f32 %v491, %v515
    %v520 = vmul.f32 %v492, %v516
    %v521 = vmul.f32 %v493, %v517
    %v522 = vmul.f32 %v494, %v518
    %v523 = vpack.c.bf16 %v520, %v519
    %v524 = vpack.c.bf16 %v522, %v521
    %v525 = vld [vmem:[#allocation5] sm:$0xff]
    %v526 = vld [vmem:[#allocation5 + $0x8] sm:$0xff]
    %v527 = vld [vmem:[#allocation5 + $0x10] sm:$0xff]
    %v528 = vld [vmem:[#allocation5 + $0x18] sm:$0xff]
    %v529 = vld [vmem:[#allocation5 + $0x20] sm:$0xff]
    %v530 = vld [vmem:[#allocation5 + $0x28] sm:$0xff]
    %v531 = vld [vmem:[#allocation5 + $0x30] sm:$0xff]
    %v532 = vld [vmem:[#allocation5 + $0x38] sm:$0xff]
    %v533 = vld [vmem:[#allocation5 + $0x40] sm:$0xff]
    %v534 = vld [vmem:[#allocation5 + $0x48] sm:$0xff]
    %v535 = vld [vmem:[#allocation5 + $0x50] sm:$0xff]
    %v536 = vld [vmem:[#allocation5 + $0x58] sm:$0xff]
    %v537 = vld [vmem:[#allocation5 + $0x60] sm:$0xff]
    %v538 = vld [vmem:[#allocation5 + $0x68] sm:$0xff]
    %v539 = vld [vmem:[#allocation5 + $0x70] sm:$0xff]
    %v540 = vld [vmem:[#allocation5 + $0x78] sm:$0xff]
    %v541 = vld [vmem:[#allocation5 + $0x80] sm:$0xff]
    %v542 = vld [vmem:[#allocation5 + $0x88] sm:$0xff]
    %v543 = vld [vmem:[#allocation5 + $0x90] sm:$0xff]
    %v544 = vld [vmem:[#allocation5 + $0x98] sm:$0xff]
    %v545 = vld [vmem:[#allocation5 + $0xa0] sm:$0xff]
    %v546 = vld [vmem:[#allocation5 + $0xa8] sm:$0xff]
    %v547 = vld [vmem:[#allocation5 + $0xb0] sm:$0xff]
    %v548 = vld [vmem:[#allocation5 + $0xb8] sm:$0xff]
    %v549 = vld [vmem:[#allocation5 + $0xc0] sm:$0xff]
    %v550 = vld [vmem:[#allocation5 + $0xc8] sm:$0xff]
    %v551 = vld [vmem:[#allocation5 + $0xd0] sm:$0xff]
    %v552 = vld [vmem:[#allocation5 + $0xd8] sm:$0xff]
    %v553 = vld [vmem:[#allocation5 + $0xe0] sm:$0xff]
    %v554 = vld [vmem:[#allocation5 + $0xe8] sm:$0xff]
    %v555 = vld [vmem:[#allocation5 + $0xf0] sm:$0xff]
    %v556 = vld [vmem:[#allocation5 + $0xf8] sm:$0xff]
    %v557 = vld [vmem:[%s3] sm:$0xf]
    %v559 = vlaneseq
    %v560 = vshrl.u32 %v559, 7
    %v561 = vsub.s32 0, %v560
    %v562 = vrot.slane %v557, %v561
    %v563 = vlaneseq
    %v564 = vshrl.u32 %v563, 7
    %v565 = vsub.s32 1, %v564
    %v566 = vrot.slane %v557, %v565
    %v567 = vlaneseq
    %v568 = vshrl.u32 %v567, 7
    %v569 = vsub.s32 2, %v568
    %v570 = vrot.slane %v557, %v569
    %v571 = vlaneseq
    %v572 = vshrl.u32 %v571, 7
    %v573 = vsub.s32 3, %v572
    %v574 = vrot.slane %v557, %v573
    %v611 = vunpack.c.l.b16 %v525
    %v612 = vunpack.c.h.b16 %v525
    %v613 = vunpack.c.l.b16 %v526
    %v614 = vunpack.c.h.b16 %v526
    %v615 = vunpack.c.l.b16 %v527
    %v616 = vunpack.c.h.b16 %v527
    %v617 = vunpack.c.l.b16 %v528
    %v618 = vunpack.c.h.b16 %v528
    %v619 = vunpack.c.l.b16 %v529
    %v620 = vunpack.c.h.b16 %v529
    %v621 = vunpack.c.l.b16 %v530
    %v622 = vunpack.c.h.b16 %v530
    %v623 = vunpack.c.l.b16 %v531
    %v624 = vunpack.c.h.b16 %v531
    %v625 = vunpack.c.l.b16 %v532
    %v626 = vunpack.c.h.b16 %v532
    %v627 = vunpack.c.l.b16 %v533
    %v628 = vunpack.c.h.b16 %v533
    %v629 = vunpack.c.l.b16 %v534
    %v630 = vunpack.c.h.b16 %v534
    %v631 = vunpack.c.l.b16 %v535
    %v632 = vunpack.c.h.b16 %v535
    %v633 = vunpack.c.l.b16 %v536
    %v634 = vunpack.c.h.b16 %v536
    %v635 = vunpack.c.l.b16 %v537
    %v636 = vunpack.c.h.b16 %v537
    %v637 = vunpack.c.l.b16 %v538
    %v638 = vunpack.c.h.b16 %v538
    %v639 = vunpack.c.l.b16 %v539
    %v640 = vunpack.c.h.b16 %v539
    %v641 = vunpack.c.l.b16 %v540
    %v642 = vunpack.c.h.b16 %v540
    %v643 = vunpack.c.l.b16 %v541
    %v644 = vunpack.c.h.b16 %v541
    %v645 = vunpack.c.l.b16 %v542
    %v646 = vunpack.c.h.b16 %v542
    %v647 = vunpack.c.l.b16 %v543
    %v648 = vunpack.c.h.b16 %v543
    %v649 = vunpack.c.l.b16 %v544
    %v650 = vunpack.c.h.b16 %v544
    %v651 = vunpack.c.l.b16 %v545
    %v652 = vunpack.c.h.b16 %v545
    %v653 = vunpack.c.l.b16 %v546
    %v654 = vunpack.c.h.b16 %v546
    %v655 = vunpack.c.l.b16 %v547
    %v656 = vunpack.c.h.b16 %v547
    %v657 = vunpack.c.l.b16 %v548
    %v658 = vunpack.c.h.b16 %v548
    %v659 = vunpack.c.l.b16 %v549
    %v660 = vunpack.c.h.b16 %v549
    %v661 = vunpack.c.l.b16 %v550
    %v662 = vunpack.c.h.b16 %v550
    %v663 = vunpack.c.l.b16 %v551
    %v664 = vunpack.c.h.b16 %v551
    %v665 = vunpack.c.l.b16 %v552
    %v666 = vunpack.c.h.b16 %v552
    %v667 = vunpack.c.l.b16 %v553
    %v668 = vunpack.c.h.b16 %v553
    %v669 = vunpack.c.l.b16 %v554
    %v670 = vunpack.c.h.b16 %v554
    %v671 = vunpack.c.l.b16 %v555
    %v672 = vunpack.c.h.b16 %v555
    %v673 = vunpack.c.l.b16 %v556
    %v674 = vunpack.c.h.b16 %v556
    %v675 = vpack.c.b16 %v615, %v611
    %v676 = vpack.c.b16 %v616, %v612
    %v677 = vpack.c.b16 %v617, %v613
    %v678 = vpack.c.b16 %v618, %v614
    %v679 = vpack.c.b16 %v623, %v619
    %v680 = vpack.c.b16 %v624, %v620
    %v681 = vpack.c.b16 %v625, %v621
    %v682 = vpack.c.b16 %v626, %v622
    %v683 = vpack.c.b16 %v631, %v627
    %v684 = vpack.c.b16 %v632, %v628
    %v685 = vpack.c.b16 %v633, %v629
    %v686 = vpack.c.b16 %v634, %v630
    %v687 = vpack.c.b16 %v639, %v635
    %v688 = vpack.c.b16 %v640, %v636
    %v689 = vpack.c.b16 %v641, %v637
    %v690 = vpack.c.b16 %v642, %v638
    %v691 = vpack.c.b16 %v647, %v643
    %v692 = vpack.c.b16 %v648, %v644
    %v693 = vpack.c.b16 %v649, %v645
    %v694 = vpack.c.b16 %v650, %v646
    %v695 = vpack.c.b16 %v655, %v651
    %v696 = vpack.c.b16 %v656, %v652
    %v697 = vpack.c.b16 %v657, %v653
    %v698 = vpack.c.b16 %v658, %v654
    %v699 = vpack.c.b16 %v663, %v659
    %v700 = vpack.c.b16 %v664, %v660
    %v701 = vpack.c.b16 %v665, %v661
    %v702 = vpack.c.b16 %v666, %v662
    %v703 = vpack.c.b16 %v671, %v667
    %v704 = vpack.c.b16 %v672, %v668
    %v705 = vpack.c.b16 %v673, %v669
    %v706 = vpack.c.b16 %v674, %v670
    %739 = vmatprep.subr.bf16.mxu0 %v676
    %740 = vmatpush1.bf16.msra.mxu0 %v675
    %741 = vmatprep.subr.bf16.mxu0 %v680
    %742 = vmatpush1.bf16.msra.mxu0 %v679
    %743 = vmatprep.subr.bf16.mxu0 %v684
    %744 = vmatpush1.bf16.msra.mxu0 %v683
    %745 = vmatprep.subr.bf16.mxu0 %v688
    %746 = vmatpush1.bf16.msra.mxu0 %v687
    %747 = vmatprep.subr.bf16.mxu0 %v692
    %748 = vmatpush1.bf16.msra.mxu0 %v691
    %749 = vmatprep.subr.bf16.mxu0 %v696
    %750 = vmatpush1.bf16.msra.mxu0 %v695
    %751 = vmatprep.subr.bf16.mxu0 %v700
    %752 = vmatpush1.bf16.msra.mxu0 %v699
    %753 = vmatprep.subr.bf16.mxu0 %v704
    %754 = vmatpush1.bf16.msra.mxu0 %v703
    %755 = vmatprep.subr.bf16.mxu0 0
    %756 = vmatpush1.bf16.msra.mxu0 0
    %757 = vmatprep.subr.bf16.mxu0 0
    %758 = vmatpush1.bf16.msra.mxu0 0
    %759 = vmatprep.subr.bf16.mxu0 0
    %760 = vmatpush1.bf16.msra.mxu0 0
    %761 = vmatprep.subr.bf16.mxu0 0
    %762 = vmatpush1.bf16.msra.mxu0 0
    %763 = vmatprep.subr.bf16.mxu0 0
    %764 = vmatpush1.bf16.msra.mxu0 0
    %765 = vmatprep.subr.bf16.mxu0 0
    %766 = vmatpush1.bf16.msra.mxu0 0
    %767 = vmatprep.subr.bf16.mxu0 0
    %768 = vmatpush1.bf16.msra.mxu0 0
    %769 = vmatprep.subr.bf16.mxu0 0
    %770 = vmatpush1.bf16.msra.mxu0 0
    %771 = vmatprep.mubr.bf16.mxu0 0
    %772 = vmatmul.mubr.bf16.gmra.mrb[0].mxu0 %v523
    %v773 = vpop.f32.mrb[0].mxu0
    %v774 = vadd.f32 %v562, %v773
    %v775 = vpop.f32.mrb[0].mxu0
    %v776 = vadd.f32 %v566, %v775
    %v777 = vpop.f32.mrb[0].mxu0
    %v778 = vadd.f32 %v562, %v777
    %v779 = vpop.f32.mrb[0].mxu0
    %v780 = vadd.f32 %v566, %v779
    %781 = vmatprep.mubr.bf16.mxu0 0
    %782 = vmatmul.mubr.bf16.gmra.mrb[0].mxu0 %v524
    %v783 = vpop.f32.mrb[0].mxu0
    %v784 = vadd.f32 %v562, %v783
    %v785 = vpop.f32.mrb[0].mxu0
    %v786 = vadd.f32 %v566, %v785
    %v787 = vpop.f32.mrb[0].mxu0
    %v788 = vadd.f32 %v562, %v787
    %v789 = vpop.f32.mrb[0].mxu0
    %v790 = vadd.f32 %v566, %v789
    %791 = vdwg.mxu0
    %792 = vmatprep.subr.bf16.mxu0 %v678
    %793 = vmatpush1.bf16.msra.mxu0 %v677
    %794 = vmatprep.subr.bf16.mxu0 %v682
    %795 = vmatpush1.bf16.msra.mxu0 %v681
    %796 = vmatprep.subr.bf16.mxu0 %v686
    %797 = vmatpush1.bf16.msra.mxu0 %v685
    %798 = vmatprep.subr.bf16.mxu0 %v690
    %799 = vmatpush1.bf16.msra.mxu0 %v689
    %800 = vmatprep.subr.bf16.mxu0 %v694
    %801 = vmatpush1.bf16.msra.mxu0 %v693
    %802 = vmatprep.subr.bf16.mxu0 %v698
    %803 = vmatpush1.bf16.msra.mxu0 %v697
    %804 = vmatprep.subr.bf16.mxu0 %v702
    %805 = vmatpush1.bf16.msra.mxu0 %v701
    %806 = vmatprep.subr.bf16.mxu0 %v706
    %807 = vmatpush1.bf16.msra.mxu0 %v705
    %808 = vmatprep.subr.bf16.mxu0 0
    %809 = vmatpush1.bf16.msra.mxu0 0
    %810 = vmatprep.subr.bf16.mxu0 0
    %811 = vmatpush1.bf16.msra.mxu0 0
    %812 = vmatprep.subr.bf16.mxu0 0
    %813 = vmatpush1.bf16.msra.mxu0 0
    %814 = vmatprep.subr.bf16.mxu0 0
    %815 = vmatpush1.bf16.msra.mxu0 0
    %816 = vmatprep.subr.bf16.mxu0 0
    %817 = vmatpush1.bf16.msra.mxu0 0
    %818 = vmatprep.subr.bf16.mxu0 0
    %819 = vmatpush1.bf16.msra.mxu0 0
    %820 = vmatprep.subr.bf16.mxu0 0
    %821 = vmatpush1.bf16.msra.mxu0 0
    %822 = vmatprep.subr.bf16.mxu0 0
    %823 = vmatpush1.bf16.msra.mxu0 0
    %824 = vmatprep.mubr.bf16.mxu0 0
    %825 = vmatmul.mubr.bf16.gmra.mrb[0].mxu0 %v523
    %v826 = vpop.f32.mrb[0].mxu0
    %v827 = vadd.f32 %v570, %v826
    %v828 = vpop.f32.mrb[0].mxu0
    %v829 = vadd.f32 %v574, %v828
    %v830 = vpop.f32.mrb[0].mxu0
    %v831 = vadd.f32 %v570, %v830
    %v832 = vpop.f32.mrb[0].mxu0
    %v833 = vadd.f32 %v574, %v832
    %834 = vmatprep.mubr.bf16.mxu0 0
    %835 = vmatmul.mubr.bf16.gmra.mrb[0].mxu0 %v524
    %v836 = vpop.f32.mrb[0].mxu0
    %v837 = vadd.f32 %v570, %v836
    %v838 = vpop.f32.mrb[0].mxu0
    %v839 = vadd.f32 %v574, %v838
    %v840 = vpop.f32.mrb[0].mxu0
    %v841 = vadd.f32 %v570, %v840
    %v842 = vpop.f32.mrb[0].mxu0
    %v843 = vadd.f32 %v574, %v842
    %844 = vdwg.mxu0
    %845 = vst [vmem:[#allocation7] sm:$0xff] %v774
    %846 = vst [vmem:[#allocation7 + $0x8] sm:$0xff] %v776
    %847 = vst [vmem:[#allocation7 + $0x10] sm:$0xff] %v827
    %848 = vst [vmem:[#allocation7 + $0x18] sm:$0xff] %v829
    %849 = vst [vmem:[#allocation7 + $0x20] sm:$0xff] %v778
    %850 = vst [vmem:[#allocation7 + $0x28] sm:$0xff] %v780
    %851 = vst [vmem:[#allocation7 + $0x30] sm:$0xff] %v831
    %852 = vst [vmem:[#allocation7 + $0x38] sm:$0xff] %v833
    %853 = vst [vmem:[#allocation7 + $0x40] sm:$0xff] %v784
    %854 = vst [vmem:[#allocation7 + $0x48] sm:$0xff] %v786
    %855 = vst [vmem:[#allocation7 + $0x50] sm:$0xff] %v837
    %856 = vst [vmem:[#allocation7 + $0x58] sm:$0xff] %v839
    %857 = vst [vmem:[#allocation7 + $0x60] sm:$0xff] %v788
    %858 = vst [vmem:[#allocation7 + $0x68] sm:$0xff] %v790
    %859 = vst [vmem:[#allocation7 + $0x70] sm:$0xff] %v841
    %860 = vst [vmem:[#allocation7 + $0x78] sm:$0xff] %v843
    // Predicated region
    $region26: #{tpu_custom_call.1} parent=1 // pred_check
      _
    $region27: #{tpu_custom_call.1} parent=1 // pred_check_branch
      %862 = sbr.rel (0) target = $region29
    $region28: #{tpu_custom_call.1} parent=1 // pred_region
      %s864 = ssub.s32 2048, 2048
      %865 = vsyncadd [#allocation4], %s864
      %s866 = sshll.u32 [#allocation7], 4
      %s867 = int_to_ptr.vmem [resolvable:$true] %s866
      %872 = dma.vmem_to_hbm [thread:$0]  %s867, 2048, %s4, [#allocation4], 512, 512, 32
    $region29: #{tpu_custom_call.1} parent=1 // pred_fallthru
      _
    // Predicated region
    $region30: #{tpu_custom_call.1} parent=1 // pred_check
      _
    $region31: #{tpu_custom_call.1} parent=1 // pred_check_branch
      %874 = sbr.rel (0) target = $region33
    $region32: #{tpu_custom_call.1} parent=1 // pred_region
      %875 = dma.done [#allocation4], 2048
    $region33: #{tpu_custom_call.1} parent=1 // pred_fallthru
      _
    %876 = vsyncpa [#allocation3], 1
    %877 = vsyncpa [#allocation6], 1
    %878 = vsyncpa [#allocation4], 1

</llo_original>
